<compile_context>
chip_gen: v7x
topology: tpu7x:2x2x1
jax: 0.10.0
libtpu: 0.0.40
codegen_flags: <defaults>
</compile_context>

<pallas_src>
import functools
import math

import jax
import jax.numpy as jnp
from jax.experimental import pallas as pl
from jax.experimental.pallas import tpu as pltpu


def _round_up(n, m):
    return ((n + m - 1) // m) * m


def _cdiv(a, b):
    return -(-a // b)


# --------------------------------------------------------------------------
# Fused kernel: x -> (Linear -> act) * L_hidden -> Linear, all in one body.
# refs layout: (x_ref, w0, b0, w1, b1, ..., w_{L-1}, b_{L-1}, o_ref)
# x: bf16 (tm, in_dim); weights: bf16 (K_l, N_l); biases: f32 (1, N_l);
# output: f32 (tm, out_dim).
# --------------------------------------------------------------------------
def _mlp_fused_kernel(*refs, layer_acts, out_dim, mxu_dtype):
    x_ref = refs[0]
    o_ref = refs[-1]
    wb_refs = refs[1:-1]

    h = x_ref[...]  # bf16 (tm, in_dim): already in MXU dtype, no cast for layer 0
    for l, act in enumerate(layer_acts):
        w = wb_refs[2 * l][...]        # bf16 (K_l, N_l)
        b = wb_refs[2 * l + 1][...]    # f32  (1, N_l)
        lhs = h if h.dtype == mxu_dtype else h.astype(mxu_dtype)
        # MXU matmul with bf16 inputs, f32 accumulation.
        y = jnp.dot(lhs, w, preferred_element_type=jnp.float32)
        y = y + b                      # f32 epilogue on VPU
        if act == "relu":
            y = jnp.maximum(y, 0.0)
        elif act == "tanh":
            y = jnp.tanh(y)
        elif act == "sigmoid":
            y = jax.nn.sigmoid(y)
        elif act is not None:
            raise ValueError(f"Unsupported activation function: {act}")
        h = y
    # Last layer's N is unpadded (== out_dim), so this slice is a no-op;
    # kept for safety if the packing code changes.
    o_ref[...] = h[:, :out_dim].astype(o_ref.dtype)


# --------------------------------------------------------------------------
# Parameter init / packing
# --------------------------------------------------------------------------
def init_mlp_params(key, input_dim, output_dim, hidden_units):
    """Deterministic init mimicking torch.nn.Linear default U(-1/sqrt(fan_in), +)."""
    params = []
    dims = [input_dim] + list(hidden_units) + [output_dim]
    for i in range(len(dims) - 1):
        in_d, out_d = dims[i], dims[i + 1]
        key, kw, kb = jax.random.split(key, 3)
        bound = 1.0 / math.sqrt(in_d)
        # Stored already transposed: (in, out) so the kernel computes x @ W + b.
        w = jax.random.uniform(kw, (in_d, out_d), jnp.float32, -bound, bound)
        b = jax.random.uniform(kb, (out_d,), jnp.float32, -bound, bound)
        params.append((w, b))
    return params


def pack_mlp_params(params, mxu_dtype=jnp.bfloat16, lane_multiple=128):
    """Pad hidden feature dims to lane multiples; weights -> bf16.

    * Layer 0 keeps K = input_dim (matches the unpadded x lanes).
    * Last layer keeps N = output_dim (kernel stores the narrow output directly).
    * Hidden dims are zero-padded to `lane_multiple` (128; use 256 on v6e/v7x
      for realistic hidden sizes to fill the 256x256 MXU).
    Invariant: padded activation lanes (0 after relu/tanh, 0.5 after sigmoid)
    are annihilated by the ZERO-padded K-rows of the next layer's weight.
    """
    in_dims = [w.shape[0] for w, _ in params]
    out_dims = [w.shape[1] for w, _ in params]
    k_pad = [in_dims[0]] + [_round_up(d, lane_multiple) for d in in_dims[1:]]
    n_pad = [_round_up(d, lane_multiple) for d in out_dims[:-1]] + [out_dims[-1]]
    packed = []
    for l, (w, b) in enumerate(params):
        in_d, out_d = w.shape
        w_p = jnp.zeros((k_pad[l], n_pad[l]), mxu_dtype)
        w_p = w_p.at[:in_d, :out_d].set(w.astype(mxu_dtype))
        b_p = jnp.zeros((1, n_pad[l]), jnp.float32)
        b_p = b_p.at[0, :out_d].set(b)
        packed.append((w_p, b_p))
    return packed


# --------------------------------------------------------------------------
# Wrapper: one pallas_call for the whole MLP
# --------------------------------------------------------------------------
def mlp_forward_fused(x, packed, activations, mxu_dtype=jnp.bfloat16):
    B, in_dim = x.shape
    num_layers = len(packed)
    assert packed[0][0].shape[0] == in_dim, "layer-0 K must equal input_dim"
    layer_acts = tuple(activations) + (None,)  # final Linear has no activation
    assert len(layer_acts) == num_layers
    out_dim = packed[-1][0].shape[1]           # last N is unpadded == output_dim

    # ---- batch tiling -----------------------------------------------------
    TM_MAX = 512                      # big tiles amortize ~0.35us/step overhead
    B_pad = _round_up(B, 16)          # full bf16 sublane group
    if B_pad <= 256:
        tm = B_pad                    # single grid step; too little work to shard
    else:
        # >= 2 steps so "parallel" shards across v7x's two TensorCores.
        n_steps = max(2, _cdiv(B_pad, TM_MAX))
        tm = _round_up(_cdiv(B_pad, n_steps), 16)
        B_pad = n_steps * tm
    grid = (B_pad // tm,)

    # ---- bf16 activation input, no feature-dim padding in HBM --------------
    if B_pad == B:
        x_p = x.astype(mxu_dtype)
    else:
        x_p = jnp.zeros((B_pad, in_dim), mxu_dtype).at[:B].set(x.astype(mxu_dtype))

    kernel = functools.partial(
        _mlp_fused_kernel, layer_acts=layer_acts, out_dim=out_dim,
        mxu_dtype=mxu_dtype)

    # x block: last dim equals the full array dim (legal even though < 128).
    in_specs = [pl.BlockSpec((tm, in_dim), lambda i: (i, 0))]
    flat_args = [x_p]
    for w_p, b_p in packed:
        kd, nd = w_p.shape
        # Constant index_map -> resident across batch tiles; single-buffered
        # (no re-fetch) so VMEM footprint is not doubled (matters on v7x).
        in_specs.append(pl.BlockSpec((kd, nd), lambda i: (0, 0),
                                     pipeline_mode=pl.Buffered(1)))
        in_specs.append(pl.BlockSpec((1, nd), lambda i: (0, 0),
                                     pipeline_mode=pl.Buffered(1)))
        flat_args.extend([w_p, b_p])

    # ---- cost estimate so XLA schedules around the custom call --------------
    flops = 2 * B_pad * sum(int(w.size) for w, _ in packed)
    transcendentals = sum(
        B_pad * int(w.shape[1])
        for (w, _), act in zip(packed, layer_acts) if act in ("tanh", "sigmoid"))
    bytes_accessed = (
        int(x_p.size) * x_p.dtype.itemsize
        + B_pad * out_dim * 4
        + sum(int(w.size) * w.dtype.itemsize + int(b.size) * b.dtype.itemsize
              for w, b in packed))

    out_p = pl.pallas_call(
        kernel,
        out_shape=jax.ShapeDtypeStruct((B_pad, out_dim), jnp.float32),
        grid=grid,
        in_specs=in_specs,
        # Narrow logical output stored directly (no lane-padded slab + slice pass).
        out_specs=pl.BlockSpec((tm, out_dim), lambda i: (i, 0)),
        compiler_params=pltpu.CompilerParams(
            dimension_semantics=("parallel",)),
        cost_estimate=pl.CostEstimate(
            flops=flops, transcendentals=transcendentals,
            bytes_accessed=bytes_accessed),
    )(*flat_args)

    return out_p if B_pad == B else out_p[:B]


# --------------------------------------------------------------------------
# Plain-JAX references for verification
# --------------------------------------------------------------------------
def _apply_act(h, act):
    if act == "relu":
        return jnp.maximum(h, 0.0)
    if act == "tanh":
        return jnp.tanh(h)
    if act == "sigmoid":
        return jax.nn.sigmoid(h)
    if act is None:
        return h
    raise ValueError(f"Unsupported activation function: {act}")


def mlp_reference(x, params, activations, cast_dtype=None):
    """Pure-JAX reference. cast_dtype mimics the kernel's bf16 MXU inputs."""
    h = x
    acts = list(activations) + [None]
    for (w, b), act in zip(params, acts):
        if cast_dtype is not None:
            y = jnp.dot(h.astype(cast_dtype), w.astype(cast_dtype),
                        preferred_element_type=jnp.float32) + b
        else:
            y = h @ w + b
        h = _apply_act(y, act)
    return h


# --------------------------------------------------------------------------
if __name__ == "__main__":
    # Shapes consistent with:
    #   MLP(input_dim=32, output_dim=16, hidden_units=[64, 32, 48],
    #       activations=['relu', 'tanh', 'sigmoid'])
    batch = 8
    input_dim = 32
    output_dim = 16
    hidden_units = [64, 32, 48]
    activations = ["relu", "tanh", "sigmoid"]

    key = jax.random.PRNGKey(0)
    key, kx = jax.random.split(key)
    x = jax.random.normal(kx, (batch, input_dim), dtype=jnp.float32)

    params = init_mlp_params(key, input_dim, output_dim, hidden_units)
    packed = pack_mlp_params(params, mxu_dtype=jnp.bfloat16)

    out = mlp_forward_fused(x, packed, activations)
    out = jax.block_until_ready(out)
    assert out.shape == (batch, output_dim)

    # Tight check vs. a reference with matching bf16-MXU-input semantics.
    ref_bf16 = mlp_reference(x, params, activations, cast_dtype=jnp.bfloat16)
    assert jnp.allclose(out, ref_bf16, atol=2e-3, rtol=2e-3), \
        "mismatch vs bf16-input reference"

    # Loose check vs. the full-f32 torch-equivalent reference.
    ref_f32 = mlp_reference(x, params, activations)
    assert jnp.allclose(out, ref_f32, atol=5e-2, rtol=5e-2), \
        "mismatch vs f32 reference"

    print("KERNEL_OK")
</pallas_src>

<mosaic_0001>
module attributes {stable_mosaic.version = 11 : i64} {
  func.func @_mlp_fused_kernel(%arg0: i32, %arg1: memref<16x32xbf16, #tpu.memory_space<vmem>>, %arg2: memref<32x128xbf16, #tpu.memory_space<vmem>>, %arg3: memref<1x128xf32, #tpu.memory_space<vmem>>, %arg4: memref<128x128xbf16, #tpu.memory_space<vmem>>, %arg5: memref<1x128xf32, #tpu.memory_space<vmem>>, %arg6: memref<128x128xbf16, #tpu.memory_space<vmem>>, %arg7: memref<1x128xf32, #tpu.memory_space<vmem>>, %arg8: memref<128x16xbf16, #tpu.memory_space<vmem>>, %arg9: memref<1x16xf32, #tpu.memory_space<vmem>>, %arg10: memref<16x16xf32, #tpu.memory_space<vmem>>) attributes {dimension_semantics = [#tpu.dimension_semantics<parallel>], iteration_bounds = array<i64: 1>, scalar_prefetch = 0 : i64, scratch_operands = 0 : i64, tpu.core_type = #tpu.core_type<tc>, window_params = [{transform_indices = @transform_0, window_bounds = array<i64: 16, 32>}, {pipeline_mode = #tpu.pipeline_mode<synchronous>, transform_indices = @transform_1, window_bounds = array<i64: 32, 128>}, {pipeline_mode = #tpu.pipeline_mode<synchronous>, transform_indices = @transform_2, window_bounds = array<i64: 1, 128>}, {pipeline_mode = #tpu.pipeline_mode<synchronous>, transform_indices = @transform_3, window_bounds = array<i64: 128, 128>}, {pipeline_mode = #tpu.pipeline_mode<synchronous>, transform_indices = @transform_4, window_bounds = array<i64: 1, 128>}, {pipeline_mode = #tpu.pipeline_mode<synchronous>, transform_indices = @transform_5, window_bounds = array<i64: 128, 128>}, {pipeline_mode = #tpu.pipeline_mode<synchronous>, transform_indices = @transform_6, window_bounds = array<i64: 1, 128>}, {pipeline_mode = #tpu.pipeline_mode<synchronous>, transform_indices = @transform_7, window_bounds = array<i64: 128, 16>}, {pipeline_mode = #tpu.pipeline_mode<synchronous>, transform_indices = @transform_8, window_bounds = array<i64: 1, 16>}, {transform_indices = @transform_9, window_bounds = array<i64: 16, 16>}]} {
    %c0 = arith.constant 0 : index
    %c0_0 = arith.constant 0 : index
    %0 = vector.load %arg1[%c0, %c0_0] : memref<16x32xbf16, #tpu.memory_space<vmem>>, vector<16x32xbf16>
    %c0_1 = arith.constant 0 : index
    %c0_2 = arith.constant 0 : index
    %1 = vector.load %arg2[%c0_1, %c0_2] : memref<32x128xbf16, #tpu.memory_space<vmem>>, vector<32x128xbf16>
    %c0_3 = arith.constant 0 : index
    %c0_4 = arith.constant 0 : index
    %2 = vector.load %arg3[%c0_3, %c0_4] : memref<1x128xf32, #tpu.memory_space<vmem>>, vector<1x128xf32>
    %cst = arith.constant dense<0.000000e+00> : vector<16x128xf32>
    %3 = tpu.matmul %0, %1, %cst {dimension_numbers = #tpu.dot_dimension_numbers<[1], [0], [0], [1], [0, 0, 1, 1], [], []>} : vector<16x32xbf16>, vector<32x128xbf16>, vector<16x128xf32> -> vector<16x128xf32>
    %4 = vector.broadcast %2 : vector<1x128xf32> to vector<16x128xf32>
    %5 = arith.addf %3, %4 : vector<16x128xf32>
    %cst_5 = arith.constant 0.000000e+00 : f32
    %6 = vector.broadcast %cst_5 : f32 to vector<16x128xf32>
    %7 = arith.maximumf %5, %6 : vector<16x128xf32>
    %c0_6 = arith.constant 0 : index
    %c0_7 = arith.constant 0 : index
    %8 = vector.load %arg4[%c0_6, %c0_7] : memref<128x128xbf16, #tpu.memory_space<vmem>>, vector<128x128xbf16>
    %c0_8 = arith.constant 0 : index
    %c0_9 = arith.constant 0 : index
    %9 = vector.load %arg5[%c0_8, %c0_9] : memref<1x128xf32, #tpu.memory_space<vmem>>, vector<1x128xf32>
    %10 = arith.truncf %7 : vector<16x128xf32> to vector<16x128xbf16>
    %cst_10 = arith.constant dense<0.000000e+00> : vector<16x128xf32>
    %11 = tpu.matmul %10, %8, %cst_10 {dimension_numbers = #tpu.dot_dimension_numbers<[1], [0], [0], [1], [0, 0, 1, 1], [], []>} : vector<16x128xbf16>, vector<128x128xbf16>, vector<16x128xf32> -> vector<16x128xf32>
    %12 = vector.broadcast %9 : vector<1x128xf32> to vector<16x128xf32>
    %13 = arith.addf %11, %12 : vector<16x128xf32>
    %14 = math.tanh %13 : vector<16x128xf32>
    %c0_11 = arith.constant 0 : index
    %c0_12 = arith.constant 0 : index
    %15 = vector.load %arg6[%c0_11, %c0_12] : memref<128x128xbf16, #tpu.memory_space<vmem>>, vector<128x128xbf16>
    %c0_13 = arith.constant 0 : index
    %c0_14 = arith.constant 0 : index
    %16 = vector.load %arg7[%c0_13, %c0_14] : memref<1x128xf32, #tpu.memory_space<vmem>>, vector<1x128xf32>
    %17 = arith.truncf %14 : vector<16x128xf32> to vector<16x128xbf16>
    %cst_15 = arith.constant dense<0.000000e+00> : vector<16x128xf32>
    %18 = tpu.matmul %17, %15, %cst_15 {dimension_numbers = #tpu.dot_dimension_numbers<[1], [0], [0], [1], [0, 0, 1, 1], [], []>} : vector<16x128xbf16>, vector<128x128xbf16>, vector<16x128xf32> -> vector<16x128xf32>
    %19 = vector.broadcast %16 : vector<1x128xf32> to vector<16x128xf32>
    %20 = arith.addf %18, %19 : vector<16x128xf32>
    %21 = arith.negf %20 : vector<16x128xf32>
    %22 = math.exp %21 : vector<16x128xf32>
    %cst_16 = arith.constant 1.000000e+00 : f32
    %23 = vector.broadcast %cst_16 : f32 to vector<16x128xf32>
    %24 = arith.addf %23, %22 : vector<16x128xf32>
    %25 = arith.divf %23, %24 : vector<16x128xf32>
    %c0_17 = arith.constant 0 : index
    %c0_18 = arith.constant 0 : index
    %26 = vector.load %arg8[%c0_17, %c0_18] : memref<128x16xbf16, #tpu.memory_space<vmem>>, vector<128x16xbf16>
    %c0_19 = arith.constant 0 : index
    %c0_20 = arith.constant 0 : index
    %27 = vector.load %arg9[%c0_19, %c0_20] : memref<1x16xf32, #tpu.memory_space<vmem>>, vector<1x16xf32>
    %28 = arith.truncf %25 : vector<16x128xf32> to vector<16x128xbf16>
    %cst_21 = arith.constant dense<0.000000e+00> : vector<16x16xf32>
    %29 = tpu.matmul %28, %26, %cst_21 {dimension_numbers = #tpu.dot_dimension_numbers<[1], [0], [0], [1], [0, 0, 1, 1], [], []>} : vector<16x128xbf16>, vector<128x16xbf16>, vector<16x16xf32> -> vector<16x16xf32>
    %30 = vector.broadcast %27 : vector<1x16xf32> to vector<16x16xf32>
    %31 = arith.addf %29, %30 : vector<16x16xf32>
    %c0_22 = arith.constant 0 : index
    %c0_23 = arith.constant 0 : index
    %32 = vector.load %arg10[%c0_22, %c0_23] : memref<16x16xf32, #tpu.memory_space<vmem>>, vector<16x16xf32>
    tpu.vector_store %arg10[%c0_22, %c0_23], %31 {strides = array<i32>} : memref<16x16xf32, #tpu.memory_space<vmem>>, vector<16x16xf32>,
    return
  }
  func.func @transform_0(%arg0: i32) -> (i32, i32) {
    %c0_i32 = arith.constant 0 : i32
    %c0_i32_0 = arith.constant 0 : i32
    return %arg0, %c0_i32 : i32, i32
  }
  func.func @transform_1(%arg0: i32) -> (i32, i32) {
    %c0_i32 = arith.constant 0 : i32
    %c0_i32_0 = arith.constant 0 : i32
    %c0_i32_1 = arith.constant 0 : i32
    return %c0_i32, %c0_i32_0 : i32, i32
  }
  func.func @transform_2(%arg0: i32) -> (i32, i32) {
    %c0_i32 = arith.constant 0 : i32
    %c0_i32_0 = arith.constant 0 : i32
    %c0_i32_1 = arith.constant 0 : i32
    return %c0_i32, %c0_i32_0 : i32, i32
  }
  func.func @transform_3(%arg0: i32) -> (i32, i32) {
    %c0_i32 = arith.constant 0 : i32
    %c0_i32_0 = arith.constant 0 : i32
    %c0_i32_1 = arith.constant 0 : i32
    return %c0_i32, %c0_i32_0 : i32, i32
  }
  func.func @transform_4(%arg0: i32) -> (i32, i32) {
    %c0_i32 = arith.constant 0 : i32
    %c0_i32_0 = arith.constant 0 : i32
    %c0_i32_1 = arith.constant 0 : i32
    return %c0_i32, %c0_i32_0 : i32, i32
  }
  func.func @transform_5(%arg0: i32) -> (i32, i32) {
    %c0_i32 = arith.constant 0 : i32
    %c0_i32_0 = arith.constant 0 : i32
    %c0_i32_1 = arith.constant 0 : i32
    return %c0_i32, %c0_i32_0 : i32, i32
  }
  func.func @transform_6(%arg0: i32) -> (i32, i32) {
    %c0_i32 = arith.constant 0 : i32
    %c0_i32_0 = arith.constant 0 : i32
    %c0_i32_1 = arith.constant 0 : i32
    return %c0_i32, %c0_i32_0 : i32, i32
  }
  func.func @transform_7(%arg0: i32) -> (i32, i32) {
    %c0_i32 = arith.constant 0 : i32
    %c0_i32_0 = arith.constant 0 : i32
    %c0_i32_1 = arith.constant 0 : i32
    return %c0_i32, %c0_i32_0 : i32, i32
  }
  func.func @transform_8(%arg0: i32) -> (i32, i32) {
    %c0_i32 = arith.constant 0 : i32
    %c0_i32_0 = arith.constant 0 : i32
    %c0_i32_1 = arith.constant 0 : i32
    return %c0_i32, %c0_i32_0 : i32, i32
  }
  func.func @transform_9(%arg0: i32) -> (i32, i32) {
    %c0_i32 = arith.constant 0 : i32
    %c0_i32_0 = arith.constant 0 : i32
    return %arg0, %c0_i32 : i32, i32
  }
}

</mosaic_0001>

<llo_original>
// kernel: tpu_custom_call.1
$region0: #{tpu_custom_call.1}
  #allocation0 [shape = 'u32[]', space=smem, size = 0x4, offset = 0x4, fixed_abs, tag = 'smem constant byte address 0x4 - core index']
  #allocation1 [shape = 'u32[144,128]{1,0:T(1,128)}', space=vmem, size = 0x12000, scoped, tag = 'internal scratch']
  %s0 = inlined_call_operand.hbm [shape: bf16[16,32], index: 0, kind: input, shape index: {}]
  %s1 = inlined_call_operand.vmem [shape: bf16[32,128], index: 1, kind: input, shape index: {}]
  %s2 = inlined_call_operand.vmem [shape: f32[1,128], index: 2, kind: input, shape index: {}]
  %s3 = inlined_call_operand.vmem [shape: bf16[128,128], index: 3, kind: input, shape index: {}]
  %s4 = inlined_call_operand.vmem [shape: f32[1,128], index: 4, kind: input, shape index: {}]
  %s5 = inlined_call_operand.hbm [shape: bf16[128,128], index: 5, kind: input, shape index: {}]
  %s6 = inlined_call_operand.vmem [shape: f32[1,128], index: 6, kind: input, shape index: {}]
  %s7 = inlined_call_operand.vmem [shape: bf16[128,16], index: 7, kind: input, shape index: {}]
  %s8 = inlined_call_operand.vmem [shape: f32[1,16], index: 8, kind: input, shape index: {}]
  %s9 = inlined_call_operand.hbm [shape: f32[16,16], index: 9, kind: output, shape index: {}]
  %s10 = sld [smem:[#allocation0]]
  $region54: #{tpu_custom_call.1} parent=0
    _
  %s12 = ssub.s32 1, %s10
  %s13 = scalar_select 0, %s12, %s10
  $region1: #{tpu_custom_call.1} parent=0
    #allocation2 [shape = 'u8[4096]{0}', space=vmem, size = 0x1000, scoped, tag = 'input window, operand 0, single buffered']
    #allocation3 [shape = 's32[1]{0}', space=sflag, size = 0x4, scoped, tag = 'scoped memory for tpu_custom_call.1']
    #allocation4 [shape = 's32[1]{0}', space=sflag, size = 0x4, scoped, tag = 'scoped memory for tpu_custom_call.1']
    #allocation5 [shape = 'u8[32768]{0}', space=vmem, size = 0x8000, scoped, tag = 'input window, operand 5, single buffered']
    #allocation6 [shape = 's32[1]{0}', space=sflag, size = 0x4, scoped, tag = 'scoped memory for tpu_custom_call.1']
    #allocation7 [shape = 'u8[8192]{0}', space=vmem, size = 0x2000, scoped, tag = 'output window, operand 0, single buffered']
    %14 = vsyncpa [#allocation3], 0
    %15 = vsyncpa [#allocation6], 0
    %16 = vsyncpa [#allocation4], 0
    // Predicated region
    $region2: #{tpu_custom_call.1} parent=1 // pred_check
      _
    $region3: #{tpu_custom_call.1} parent=1 // pred_check_branch
      %18 = sbr.rel (0) target = $region5
    $region4: #{tpu_custom_call.1} parent=1 // pred_region
      %s20 = ssub.s32 128, 128
      %21 = vsyncadd [#allocation3], %s20
      %s22 = sshll.u32 [#allocation2], 4
      %s23 = int_to_ptr.vmem [resolvable:$true] %s22
      %28 = dma.hbm_to_vmem [thread:$0]  %s0, 128, %s23, [#allocation3], 64, 64, 4
    $region5: #{tpu_custom_call.1} parent=1 // pred_fallthru
      _
    // Predicated region
    $region6: #{tpu_custom_call.1} parent=1 // pred_check
      _
    $region7: #{tpu_custom_call.1} parent=1 // pred_check_branch
      %30 = sbr.rel (0) target = $region9
    $region8: #{tpu_custom_call.1} parent=1 // pred_region
      _
    $region9: #{tpu_custom_call.1} parent=1 // pred_fallthru
      _
    // Predicated region
    $region10: #{tpu_custom_call.1} parent=1 // pred_check
      _
    $region11: #{tpu_custom_call.1} parent=1 // pred_check_branch
      %32 = sbr.rel (0) target = $region13
    $region12: #{tpu_custom_call.1} parent=1 // pred_region
      _
    $region13: #{tpu_custom_call.1} parent=1 // pred_fallthru
      _
    // Predicated region
    $region14: #{tpu_custom_call.1} parent=1 // pred_check
      _
    $region15: #{tpu_custom_call.1} parent=1 // pred_check_branch
      %34 = sbr.rel (0) target = $region17
    $region16: #{tpu_custom_call.1} parent=1 // pred_region
      _
    $region17: #{tpu_custom_call.1} parent=1 // pred_fallthru
      _
    // Predicated region
    $region18: #{tpu_custom_call.1} parent=1 // pred_check
      _
    $region19: #{tpu_custom_call.1} parent=1 // pred_check_branch
      %36 = sbr.rel (0) target = $region21
    $region20: #{tpu_custom_call.1} parent=1 // pred_region
      _
    $region21: #{tpu_custom_call.1} parent=1 // pred_fallthru
      _
    // Predicated region
    $region22: #{tpu_custom_call.1} parent=1 // pred_check
      _
    $region23: #{tpu_custom_call.1} parent=1 // pred_check_branch
      %38 = sbr.rel (0) target = $region25
    $region24: #{tpu_custom_call.1} parent=1 // pred_region
      %s40 = ssub.s32 1024, 1024
      %41 = vsyncadd [#allocation6], %s40
      %s42 = sshll.u32 [#allocation5], 4
      %s43 = int_to_ptr.vmem [resolvable:$true] %s42
      %48 = dma.hbm_to_vmem [thread:$0]  %s5, 1024, %s43, [#allocation6], 64, 64, 4
    $region25: #{tpu_custom_call.1} parent=1 // pred_fallthru
      _
    // Predicated region
    $region26: #{tpu_custom_call.1} parent=1 // pred_check
      _
    $region27: #{tpu_custom_call.1} parent=1 // pred_check_branch
      %50 = sbr.rel (0) target = $region29
    $region28: #{tpu_custom_call.1} parent=1 // pred_region
      _
    $region29: #{tpu_custom_call.1} parent=1 // pred_fallthru
      _
    // Predicated region
    $region30: #{tpu_custom_call.1} parent=1 // pred_check
      _
    $region31: #{tpu_custom_call.1} parent=1 // pred_check_branch
      %52 = sbr.rel (0) target = $region33
    $region32: #{tpu_custom_call.1} parent=1 // pred_region
      _
    $region33: #{tpu_custom_call.1} parent=1 // pred_fallthru
      _
    // Predicated region
    $region34: #{tpu_custom_call.1} parent=1 // pred_check
      _
    $region35: #{tpu_custom_call.1} parent=1 // pred_check_branch
      %54 = sbr.rel (0) target = $region37
    $region36: #{tpu_custom_call.1} parent=1 // pred_region
      _
    $region37: #{tpu_custom_call.1} parent=1 // pred_fallthru
      _
    // Predicated region
    $region38: #{tpu_custom_call.1} parent=1 // pred_check
      _
    $region39: #{tpu_custom_call.1} parent=1 // pred_check_branch
      %56 = sbr.rel (0) target = $region41
    $region40: #{tpu_custom_call.1} parent=1 // pred_region
      %57 = dma.done [#allocation3], 128
    $region41: #{tpu_custom_call.1} parent=1 // pred_fallthru
      _
    // Predicated region
    $region42: #{tpu_custom_call.1} parent=1 // pred_check
      _
    $region43: #{tpu_custom_call.1} parent=1 // pred_check_branch
      %59 = sbr.rel (0) target = $region45
    $region44: #{tpu_custom_call.1} parent=1 // pred_region
      %60 = dma.done [#allocation6], 1024
    $region45: #{tpu_custom_call.1} parent=1 // pred_fallthru
      _
    %v62 = vld [vmem:[#allocation2] sm:$0xf]
    %v63 = vld [vmem:[#allocation2 + $0x4] sm:$0xf]
    %v64 = vld [vmem:[%s1] sm:$0xf]
    %v65 = vld [vmem:[%s1 + $0x4] sm:$0xf]
    %v66 = vld [vmem:[%s1 + $0x8] sm:$0xf]
    %v67 = vld [vmem:[%s1 + $0xc] sm:$0xf]
    %v68 = vld [vmem:[%s2] sm:$0x1]
    %v70 = vlaneseq
    %v71 = vshrl.u32 %v70, 7
    %v72 = vsub.s32 0, %v71
    %v73 = vrot.slane %v68, %v72
    %v77 = vunpack.c.l.b16 %v62
    %v78 = vunpack.c.l.b16 %v63
    %v79 = vpack.c.b16 %v78, %v77
    %v84 = vunpack.c.l.b16 %v64
    %v85 = vunpack.c.l.b16 %v65
    %v86 = vunpack.c.l.b16 %v66
    %v87 = vunpack.c.l.b16 %v67
    %v88 = vpack.c.b16 %v85, %v84
    %v89 = vpack.c.b16 %v87, %v86
    %vm92 = vcmask 261120
    %v94 = vsel %vm92, %v79, 0
    %96 = vmatprep.subr.bf16.mxu0 0
    %97 = vmatpush1.bf16.msra.mxu0 %v88
    %98 = vmatprep.subr.bf16.mxu0 0
    %99 = vmatpush1.bf16.msra.mxu0 %v89
    %100 = vmatprep.subr.bf16.mxu0 0
    %101 = vmatpush1.bf16.msra.mxu0 0
    %102 = vmatprep.subr.bf16.mxu0 0
    %103 = vmatpush1.bf16.msra.mxu0 0
    %104 = vmatprep.subr.bf16.mxu0 0
    %105 = vmatpush1.bf16.msra.mxu0 0
    %106 = vmatprep.subr.bf16.mxu0 0
    %107 = vmatpush1.bf16.msra.mxu0 0
    %108 = vmatprep.subr.bf16.mxu0 0
    %109 = vmatpush1.bf16.msra.mxu0 0
    %110 = vmatprep.subr.bf16.mxu0 0
    %111 = vmatpush1.bf16.msra.mxu0 0
    %112 = vmatprep.subr.bf16.mxu0 0
    %113 = vmatpush1.bf16.msra.mxu0 0
    %114 = vmatprep.subr.bf16.mxu0 0
    %115 = vmatpush1.bf16.msra.mxu0 0
    %116 = vmatprep.subr.bf16.mxu0 0
    %117 = vmatpush1.bf16.msra.mxu0 0
    %118 = vmatprep.subr.bf16.mxu0 0
    %119 = vmatpush1.bf16.msra.mxu0 0
    %120 = vmatprep.subr.bf16.mxu0 0
    %121 = vmatpush1.bf16.msra.mxu0 0
    %122 = vmatprep.subr.bf16.mxu0 0
    %123 = vmatpush1.bf16.msra.mxu0 0
    %124 = vmatprep.subr.bf16.mxu0 0
    %125 = vmatpush1.bf16.msra.mxu0 0
    %126 = vmatprep.subr.bf16.mxu0 0
    %127 = vmatpush1.bf16.msra.mxu0 0
    %128 = vmatprep.mubr.bf16.mxu0 0
    %129 = vmatmul.mubr.bf16.gmra.mrb[0].mxu0 %v94
    %v130 = vpop.f32.mrb[0].mxu0
    %v131 = vadd.f32 %v73, %v130
    %v132 = vpop.f32.mrb[0].mxu0
    %v133 = vpop.f32.mrb[0].mxu0
    %v134 = vadd.f32 %v73, %v133
    %v135 = vpop.f32.mrb[0].mxu0
    %136 = vdwg.mxu0
    %v137 = vmax.f32 %v131, 0.0
    %v138 = vmax.f32 %v134, 0.0
    %v139 = vld [vmem:[%s3] sm:$0xf]
    %v140 = vld [vmem:[%s3 + $0x4] sm:$0xf]
    %v141 = vld [vmem:[%s3 + $0x8] sm:$0xf]
    %v142 = vld [vmem:[%s3 + $0xc] sm:$0xf]
    %v143 = vld [vmem:[%s3 + $0x10] sm:$0xf]
    %v144 = vld [vmem:[%s3 + $0x14] sm:$0xf]
    %v145 = vld [vmem:[%s3 + $0x18] sm:$0xf]
    %v146 = vld [vmem:[%s3 + $0x1c] sm:$0xf]
    %v147 = vld [vmem:[%s3 + $0x20] sm:$0xf]
    %v148 = vld [vmem:[%s3 + $0x24] sm:$0xf]
    %v149 = vld [vmem:[%s3 + $0x28] sm:$0xf]
    %v150 = vld [vmem:[%s3 + $0x2c] sm:$0xf]
    %v151 = vld [vmem:[%s3 + $0x30] sm:$0xf]
    %v152 = vld [vmem:[%s3 + $0x34] sm:$0xf]
    %v153 = vld [vmem:[%s3 + $0x38] sm:$0xf]
    %v154 = vld [vmem:[%s3 + $0x3c] sm:$0xf]
    %v155 = vld [vmem:[%s4] sm:$0x1]
    %v156 = vpack.c.bf16 %v138, %v137
    %v158 = vlaneseq
    %v159 = vshrl.u32 %v158, 7
    %v160 = vsub.s32 0, %v159
    %v161 = vrot.slane %v155, %v160
    %v179 = vunpack.c.l.b16 %v139
    %v180 = vunpack.c.l.b16 %v140
    %v181 = vunpack.c.l.b16 %v141
    %v182 = vunpack.c.l.b16 %v142
    %v183 = vunpack.c.l.b16 %v143
    %v184 = vunpack.c.l.b16 %v144
    %v185 = vunpack.c.l.b16 %v145
    %v186 = vunpack.c.l.b16 %v146
    %v187 = vunpack.c.l.b16 %v147
    %v188 = vunpack.c.l.b16 %v148
    %v189 = vunpack.c.l.b16 %v149
    %v190 = vunpack.c.l.b16 %v150
    %v191 = vunpack.c.l.b16 %v151
    %v192 = vunpack.c.l.b16 %v152
    %v193 = vunpack.c.l.b16 %v153
    %v194 = vunpack.c.l.b16 %v154
    %v195 = vpack.c.b16 %v180, %v179
    %v196 = vpack.c.b16 %v182, %v181
    %v197 = vpack.c.b16 %v184, %v183
    %v198 = vpack.c.b16 %v186, %v185
    %v199 = vpack.c.b16 %v188, %v187
    %v200 = vpack.c.b16 %v190, %v189
    %v201 = vpack.c.b16 %v192, %v191
    %v202 = vpack.c.b16 %v194, %v193
    %211 = vmatprep.subr.bf16.mxu0 0
    %212 = vmatpush1.bf16.msra.mxu0 %v195
    %213 = vmatprep.subr.bf16.mxu0 0
    %214 = vmatpush1.bf16.msra.mxu0 %v196
    %215 = vmatprep.subr.bf16.mxu0 0
    %216 = vmatpush1.bf16.msra.mxu0 %v197
    %217 = vmatprep.subr.bf16.mxu0 0
    %218 = vmatpush1.bf16.msra.mxu0 %v198
    %219 = vmatprep.subr.bf16.mxu0 0
    %220 = vmatpush1.bf16.msra.mxu0 %v199
    %221 = vmatprep.subr.bf16.mxu0 0
    %222 = vmatpush1.bf16.msra.mxu0 %v200
    %223 = vmatprep.subr.bf16.mxu0 0
    %224 = vmatpush1.bf16.msra.mxu0 %v201
    %225 = vmatprep.subr.bf16.mxu0 0
    %226 = vmatpush1.bf16.msra.mxu0 %v202
    %227 = vmatprep.subr.bf16.mxu0 0
    %228 = vmatpush1.bf16.msra.mxu0 0
    %229 = vmatprep.subr.bf16.mxu0 0
    %230 = vmatpush1.bf16.msra.mxu0 0
    %231 = vmatprep.subr.bf16.mxu0 0
    %232 = vmatpush1.bf16.msra.mxu0 0
    %233 = vmatprep.subr.bf16.mxu0 0
    %234 = vmatpush1.bf16.msra.mxu0 0
    %235 = vmatprep.subr.bf16.mxu0 0
    %236 = vmatpush1.bf16.msra.mxu0 0
    %237 = vmatprep.subr.bf16.mxu0 0
    %238 = vmatpush1.bf16.msra.mxu0 0
    %239 = vmatprep.subr.bf16.mxu0 0
    %240 = vmatpush1.bf16.msra.mxu0 0
    %241 = vmatprep.subr.bf16.mxu0 0
    %242 = vmatpush1.bf16.msra.mxu0 0
    %243 = vmatprep.mubr.bf16.mxu0 0
    %244 = vmatmul.mubr.bf16.gmra.mrb[0].mxu0 %v156
    %v245 = vpop.f32.mrb[0].mxu0
    %v246 = vadd.f32 %v161, %v245
    %v247 = vpop.f32.mrb[0].mxu0
    %v248 = vpop.f32.mrb[0].mxu0
    %v249 = vadd.f32 %v161, %v248
    %v250 = vpop.f32.mrb[0].mxu0
    %251 = vdwg.mxu0
    %v252 = vtanh.pop %v246
    %v253 = vtanh.pop %v249
    %v254 = vld [vmem:[#allocation5] sm:$0xf]
    %v255 = vld [vmem:[#allocation5 + $0x4] sm:$0xf]
    %v256 = vld [vmem:[#allocation5 + $0x8] sm:$0xf]
    %v257 = vld [vmem:[#allocation5 + $0xc] sm:$0xf]
    %v258 = vld [vmem:[#allocation5 + $0x10] sm:$0xf]
    %v259 = vld [vmem:[#allocation5 + $0x14] sm:$0xf]
    %v260 = vld [vmem:[#allocation5 + $0x18] sm:$0xf]
    %v261 = vld [vmem:[#allocation5 + $0x1c] sm:$0xf]
    %v262 = vld [vmem:[#allocation5 + $0x20] sm:$0xf]
    %v263 = vld [vmem:[#allocation5 + $0x24] sm:$0xf]
    %v264 = vld [vmem:[#allocation5 + $0x28] sm:$0xf]
    %v265 = vld [vmem:[#allocation5 + $0x2c] sm:$0xf]
    %v266 = vld [vmem:[#allocation5 + $0x30] sm:$0xf]
    %v267 = vld [vmem:[#allocation5 + $0x34] sm:$0xf]
    %v268 = vld [vmem:[#allocation5 + $0x38] sm:$0xf]
    %v269 = vld [vmem:[#allocation5 + $0x3c] sm:$0xf]
    %v270 = vld [vmem:[%s6] sm:$0x1]
    %v271 = vpack.c.bf16 %v253, %v252
    %v273 = vlaneseq
    %v274 = vshrl.u32 %v273, 7
    %v275 = vsub.s32 0, %v274
    %v276 = vrot.slane %v270, %v275
    %v294 = vunpack.c.l.b16 %v254
    %v295 = vunpack.c.l.b16 %v255
    %v296 = vunpack.c.l.b16 %v256
    %v297 = vunpack.c.l.b16 %v257
    %v298 = vunpack.c.l.b16 %v258
    %v299 = vunpack.c.l.b16 %v259
    %v300 = vunpack.c.l.b16 %v260
    %v301 = vunpack.c.l.b16 %v261
    %v302 = vunpack.c.l.b16 %v262
    %v303 = vunpack.c.l.b16 %v263
    %v304 = vunpack.c.l.b16 %v264
    %v305 = vunpack.c.l.b16 %v265
    %v306 = vunpack.c.l.b16 %v266
    %v307 = vunpack.c.l.b16 %v267
    %v308 = vunpack.c.l.b16 %v268
    %v309 = vunpack.c.l.b16 %v269
    %v310 = vpack.c.b16 %v295, %v294
    %v311 = vpack.c.b16 %v297, %v296
    %v312 = vpack.c.b16 %v299, %v298
    %v313 = vpack.c.b16 %v301, %v300
    %v314 = vpack.c.b16 %v303, %v302
    %v315 = vpack.c.b16 %v305, %v304
    %v316 = vpack.c.b16 %v307, %v306
    %v317 = vpack.c.b16 %v309, %v308
    %326 = vmatprep.subr.bf16.mxu0 0
    %327 = vmatpush1.bf16.msra.mxu0 %v310
    %328 = vmatprep.subr.bf16.mxu0 0
    %329 = vmatpush1.bf16.msra.mxu0 %v311
    %330 = vmatprep.subr.bf16.mxu0 0
    %331 = vmatpush1.bf16.msra.mxu0 %v312
    %332 = vmatprep.subr.bf16.mxu0 0
    %333 = vmatpush1.bf16.msra.mxu0 %v313
    %334 = vmatprep.subr.bf16.mxu0 0
    %335 = vmatpush1.bf16.msra.mxu0 %v314
    %336 = vmatprep.subr.bf16.mxu0 0
    %337 = vmatpush1.bf16.msra.mxu0 %v315
    %338 = vmatprep.subr.bf16.mxu0 0
    %339 = vmatpush1.bf16.msra.mxu0 %v316
    %340 = vmatprep.subr.bf16.mxu0 0
    %341 = vmatpush1.bf16.msra.mxu0 %v317
    %342 = vmatprep.subr.bf16.mxu0 0
    %343 = vmatpush1.bf16.msra.mxu0 0
    %344 = vmatprep.subr.bf16.mxu0 0
    %345 = vmatpush1.bf16.msra.mxu0 0
    %346 = vmatprep.subr.bf16.mxu0 0
    %347 = vmatpush1.bf16.msra.mxu0 0
    %348 = vmatprep.subr.bf16.mxu0 0
    %349 = vmatpush1.bf16.msra.mxu0 0
    %350 = vmatprep.subr.bf16.mxu0 0
    %351 = vmatpush1.bf16.msra.mxu0 0
    %352 = vmatprep.subr.bf16.mxu0 0
    %353 = vmatpush1.bf16.msra.mxu0 0
    %354 = vmatprep.subr.bf16.mxu0 0
    %355 = vmatpush1.bf16.msra.mxu0 0
    %356 = vmatprep.subr.bf16.mxu0 0
    %357 = vmatpush1.bf16.msra.mxu0 0
    %358 = vmatprep.mubr.bf16.mxu0 0
    %359 = vmatmul.mubr.bf16.gmra.mrb[0].mxu0 %v271
    %v360 = vpop.f32.mrb[0].mxu0
    %v361 = vadd.f32 %v276, %v360
    %v362 = vpop.f32.mrb[0].mxu0
    %v363 = vpop.f32.mrb[0].mxu0
    %v364 = vadd.f32 %v276, %v363
    %v365 = vpop.f32.mrb[0].mxu0
    %366 = vdwg.mxu0
    %v367 = vxor.u32 %v361, 2147483648
    %v368 = vxor.u32 %v364, 2147483648
    %v369 = vmul.f32 %v367, 1.442695
    %v370 = vpow.pop %v369
    %v371 = vmul.f32 %v368, 1.442695
    %v372 = vpow.pop %v371
    %v373 = vadd.f32 %v370, 1.0
    %v374 = vadd.f32 %v372, 1.0
    %v375 = vrcp.pop %v373
    %v376 = vmul.f32 1.0, %v375
    %v377 = vrcp.pop %v374
    %v378 = vmul.f32 1.0, %v377
    %v379 = vld [vmem:[%s7] sm:$0xf]
    %v380 = vld [vmem:[%s7 + $0x4] sm:$0xf]
    %v381 = vld [vmem:[%s7 + $0x8] sm:$0xf]
    %v382 = vld [vmem:[%s7 + $0xc] sm:$0xf]
    %v383 = vld [vmem:[%s7 + $0x10] sm:$0xf]
    %v384 = vld [vmem:[%s7 + $0x14] sm:$0xf]
    %v385 = vld [vmem:[%s7 + $0x18] sm:$0xf]
    %v386 = vld [vmem:[%s7 + $0x1c] sm:$0xf]
    %v387 = vld [vmem:[%s7 + $0x20] sm:$0xf]
    %v388 = vld [vmem:[%s7 + $0x24] sm:$0xf]
    %v389 = vld [vmem:[%s7 + $0x28] sm:$0xf]
    %v390 = vld [vmem:[%s7 + $0x2c] sm:$0xf]
    %v391 = vld [vmem:[%s7 + $0x30] sm:$0xf]
    %v392 = vld [vmem:[%s7 + $0x34] sm:$0xf]
    %v393 = vld [vmem:[%s7 + $0x38] sm:$0xf]
    %v394 = vld [vmem:[%s7 + $0x3c] sm:$0xf]
    %v395 = vld [vmem:[%s8] sm:$0x1]
    %v396 = vpack.c.bf16 %v378, %v376
    %v398 = vlaneseq
    %v399 = vshrl.u32 %v398, 7
    %v400 = vsub.s32 0, %v399
    %v401 = vrot.slane %v395, %v400
    %v419 = vunpack.c.l.b16 %v379
    %v420 = vunpack.c.l.b16 %v380
    %v421 = vunpack.c.l.b16 %v381
    %v422 = vunpack.c.l.b16 %v382
    %v423 = vunpack.c.l.b16 %v383
    %v424 = vunpack.c.l.b16 %v384
    %v425 = vunpack.c.l.b16 %v385
    %v426 = vunpack.c.l.b16 %v386
    %v427 = vunpack.c.l.b16 %v387
    %v428 = vunpack.c.l.b16 %v388
    %v429 = vunpack.c.l.b16 %v389
    %v430 = vunpack.c.l.b16 %v390
    %v431 = vunpack.c.l.b16 %v391
    %v432 = vunpack.c.l.b16 %v392
    %v433 = vunpack.c.l.b16 %v393
    %v434 = vunpack.c.l.b16 %v394
    %v435 = vpack.c.b16 %v420, %v419
    %v436 = vpack.c.b16 %v422, %v421
    %v437 = vpack.c.b16 %v424, %v423
    %v438 = vpack.c.b16 %v426, %v425
    %v439 = vpack.c.b16 %v428, %v427
    %v440 = vpack.c.b16 %v430, %v429
    %v441 = vpack.c.b16 %v432, %v431
    %v442 = vpack.c.b16 %v434, %v433
    %451 = vmatprep.subr.bf16.mxu0 0
    %452 = vmatpush1.bf16.msra.mxu0 %v435
    %453 = vmatprep.subr.bf16.mxu0 0
    %454 = vmatpush1.bf16.msra.mxu0 %v436
    %455 = vmatprep.subr.bf16.mxu0 0
    %456 = vmatpush1.bf16.msra.mxu0 %v437
    %457 = vmatprep.subr.bf16.mxu0 0
    %458 = vmatpush1.bf16.msra.mxu0 %v438
    %459 = vmatprep.subr.bf16.mxu0 0
    %460 = vmatpush1.bf16.msra.mxu0 %v439
    %461 = vmatprep.subr.bf16.mxu0 0
    %462 = vmatpush1.bf16.msra.mxu0 %v440
    %463 = vmatprep.subr.bf16.mxu0 0
    %464 = vmatpush1.bf16.msra.mxu0 %v441
    %465 = vmatprep.subr.bf16.mxu0 0
    %466 = vmatpush1.bf16.msra.mxu0 %v442
    %467 = vmatprep.subr.bf16.mxu0 0
    %468 = vmatpush1.bf16.msra.mxu0 0
    %469 = vmatprep.subr.bf16.mxu0 0
    %470 = vmatpush1.bf16.msra.mxu0 0
    %471 = vmatprep.subr.bf16.mxu0 0
    %472 = vmatpush1.bf16.msra.mxu0 0
    %473 = vmatprep.subr.bf16.mxu0 0
    %474 = vmatpush1.bf16.msra.mxu0 0
    %475 = vmatprep.subr.bf16.mxu0 0
    %476 = vmatpush1.bf16.msra.mxu0 0
    %477 = vmatprep.subr.bf16.mxu0 0
    %478 = vmatpush1.bf16.msra.mxu0 0
    %479 = vmatprep.subr.bf16.mxu0 0
    %480 = vmatpush1.bf16.msra.mxu0 0
    %481 = vmatprep.subr.bf16.mxu0 0
    %482 = vmatpush1.bf16.msra.mxu0 0
    %483 = vmatprep.mubr.bf16.mxu0 0
    %484 = vmatmul.mubr.bf16.gmra.mrb[0].mxu0 %v396
    %v485 = vpop.f32.mrb[0].mxu0
    %v486 = vadd.f32 %v401, %v485
    %v487 = vpop.f32.mrb[0].mxu0
    %v488 = vpop.f32.mrb[0].mxu0
    %v489 = vadd.f32 %v401, %v488
    %v490 = vpop.f32.mrb[0].mxu0
    %491 = vdwg.mxu0
    %vm492 = vcmask 130048
    %493 = vst.msk [vmem:[#allocation7] sm:$0xff] %vm492, %v486
    %494 = vst.msk [vmem:[#allocation7 + $0x8] sm:$0xff] %vm492, %v489
    // Predicated region
    $region46: #{tpu_custom_call.1} parent=1 // pred_check
      _
    $region47: #{tpu_custom_call.1} parent=1 // pred_check_branch
      %496 = sbr.rel (0) target = $region49
    $region48: #{tpu_custom_call.1} parent=1 // pred_region
      %s498 = ssub.s32 256, 256
      %499 = vsyncadd [#allocation4], %s498
      %s500 = sshll.u32 [#allocation7], 4
      %s501 = int_to_ptr.vmem [resolvable:$true] %s500
      %506 = dma.vmem_to_hbm [thread:$0]  %s501, 256, %s9, [#allocation4], 128, 128, 8
    $region49: #{tpu_custom_call.1} parent=1 // pred_fallthru
      _
    // Predicated region
    $region50: #{tpu_custom_call.1} parent=1 // pred_check
      _
    $region51: #{tpu_custom_call.1} parent=1 // pred_check_branch
      %508 = sbr.rel (0) target = $region53
    $region52: #{tpu_custom_call.1} parent=1 // pred_region
      %509 = dma.done [#allocation4], 256
    $region53: #{tpu_custom_call.1} parent=1 // pred_fallthru
      _
    %510 = vsyncpa [#allocation3], 1
    %511 = vsyncpa [#allocation6], 1
    %512 = vsyncpa [#allocation4], 1

</llo_original>
